<compile_context>
chip_gen: v7x
topology: tpu7x:2x2x1
jax: 0.10.0
libtpu: 0.0.40
codegen_flags: <defaults>
</compile_context>

<pallas_src>
import jax
import jax.numpy as jnp
from jax.experimental import pallas as pl
from jax.experimental.pallas import tpu as pltpu

LANE = 128
ACC_ROWS = 32                    # 4 vregs of accumulator -> ILP in the add chain
MAX_ROW_TILE = 8192              # (8192,128) f32 = 4 MiB per input per buffer
VMEM_LIMIT = 32 * 1024 * 1024    # raise v5e default (16 MiB); == v6e/v7x default


def _num_tensorcores() -> int:
    """TensorCores addressable by one pallas_call: 2 on v7x, else 1."""
    try:
        kind = str(jax.devices()[0].device_kind).lower()
    except Exception:
        return 1
    return 2 if ("v7" in kind or "7x" in kind) else 1


def _make_kernel(rows, row_tile, steps_per_part, needs_mask, acc_rows):
    """Builds the kernel with all tiling parameters baked in statically."""
    if row_tile % acc_rows == 0:
        fold_rows = acc_rows
    elif row_tile % 8 == 0:
        fold_rows = 8
    else:
        fold_rows = 1          # tiny full-extent tiles only

    def fold(x):
        # (row_tile, 128) -> (fold_rows, 128) with pure VPU adds; fold_rows
        # independent result vregs keep the dependent-add chain off the
        # critical path.
        if fold_rows == 1:
            return x.sum(axis=0, keepdims=True)
        return x.reshape(row_tile // fold_rows, fold_rows, LANE).sum(axis=0)

    def kernel(gen_ref, gt_ref, out_ref):
        p = pl.program_id(0)   # TensorCore partition axis ("parallel")
        i = pl.program_id(1)   # reduction axis over row tiles ("arbitrary")

        @pl.when(i == 0)
        def _():
            out_ref[...] = jnp.zeros_like(out_ref)

        d = gen_ref[...].astype(jnp.float32) - gt_ref[...].astype(jnp.float32)
        sq = d * d   # == abs((a-b)**2): x^2 >= 0, so the abs is an identity

        if not needs_mask:
            out_ref[0:fold_rows, :] += fold(sq)
        else:
            # Unclamped logical base row of this tile; duplicate clamped tiles
            # (base >= rows) fall into the masked branch and contribute 0.
            base = (p * steps_per_part + i) * row_tile
            tile_full = base + row_tile <= rows

            @pl.when(tile_full)
            def _():
                out_ref[0:fold_rows, :] += fold(sq)

            @pl.when(jnp.logical_not(tile_full))
            def _():
                row_idx = base + jax.lax.broadcasted_iota(
                    jnp.int32, (row_tile, LANE), 0
                )
                # select-after-arithmetic: discards stale NaN/Inf in OOB rows
                masked = jnp.where(row_idx < rows, sq, 0.0)
                out_ref[0:fold_rows, :] += fold(masked)

    return kernel


def intensity_loss(gen_frames: jax.Array, gt_frames: jax.Array,
                   *, max_row_tile: int = MAX_ROW_TILE) -> jax.Array:
    """Pallas equivalent of torch.mean(torch.abs((gen_frames - gt_frames) ** 2))."""
    assert gen_frames.shape == gt_frames.shape
    n_elems = gen_frames.size
    assert n_elems > 0

    gen_flat = gen_frames.reshape(-1)
    gt_flat = gt_frames.reshape(-1)

    # Lane alignment only.  Typical NCHW frame tensors are already 128-aligned
    # so this branch never runs; the <=127 padded zeros contribute 0 to the sum.
    padded = ((n_elems + LANE - 1) // LANE) * LANE
    if padded != n_elems:
        gen_flat = jnp.pad(gen_flat, (0, padded - n_elems))
        gt_flat = jnp.pad(gt_flat, (0, padded - n_elems))

    rows = padded // LANE
    gen2d = gen_flat.reshape(rows, LANE)
    gt2d = gt_flat.reshape(rows, LANE)

    # Full-extent block when small (always legal), otherwise a big
    # bandwidth-friendly tile.
    row_tile = rows if rows <= max_row_tile else max_row_tile

    s_total = pl.cdiv(rows, row_tile)                      # total row tiles
    num_parts = 2 if (_num_tensorcores() >= 2 and s_total >= 2) else 1
    steps_per_part = pl.cdiv(s_total, num_parts)
    # Mask needed only when (parts x steps x tile) over-covers the true rows.
    needs_mask = (num_parts * steps_per_part * row_tile) != rows

    if num_parts * steps_per_part > s_total:
        # Clamp duplicate tail tiles so the DMA never indexes past the array;
        # their contribution is zeroed by the in-kernel row mask.
        def in_index(p, i):
            return (jnp.minimum(p * steps_per_part + i, s_total - 1), 0)
    else:
        def in_index(p, i):
            return (p * steps_per_part + i, 0)

    kernel = _make_kernel(rows, row_tile, steps_per_part, needs_mask, ACC_ROWS)

    itemsize = jnp.dtype(gen_frames.dtype).itemsize
    cost = pl.CostEstimate(
        flops=3 * n_elems,                 # sub, mul, add per element
        transcendentals=0,
        bytes_accessed=2 * padded * itemsize + num_parts * ACC_ROWS * LANE * 4,
    )

    partials = pl.pallas_call(
        kernel,
        out_shape=jax.ShapeDtypeStruct((num_parts * ACC_ROWS, LANE), jnp.float32),
        grid_spec=pltpu.PrefetchScalarGridSpec(
            num_scalar_prefetch=0,
            grid=(num_parts, steps_per_part),
            in_specs=[
                pl.BlockSpec((row_tile, LANE), in_index),
                pl.BlockSpec((row_tile, LANE), in_index),
            ],
            out_specs=pl.BlockSpec((ACC_ROWS, LANE), lambda p, i: (p, 0)),
        ),
        compiler_params=pltpu.CompilerParams(
            dimension_semantics=("parallel", "arbitrary"),
            vmem_limit_bytes=VMEM_LIMIT,
        ),
        cost_estimate=cost,
    )(gen2d, gt2d)

    # Single cheap cross-lane/sublane reduce outside the kernel, then the mean.
    total = jnp.sum(partials)
    return (total / jnp.float32(n_elems)).astype(gen_frames.dtype)


if __name__ == "__main__":
    key = jax.random.PRNGKey(0)
    k1, k2, k3, k4, k5, k6 = jax.random.split(key, 6)

    # 1) Small frame-like tensors (NCHW), as in the PyTorch module.
    gen_frames = jax.random.normal(k1, (2, 4, 16, 16), dtype=jnp.float32)
    gt_frames = jax.random.normal(k2, (2, 4, 16, 16), dtype=jnp.float32)
    loss = intensity_loss(gen_frames, gt_frames)
    jax.block_until_ready(loss)
    ref = jnp.mean(jnp.abs((gen_frames - gt_frames) ** 2))
    assert jnp.allclose(loss, ref, rtol=1e-5, atol=1e-6), (loss, ref)

    # 2) Small shape, artificially small tile -> exercises the multi-tile grid,
    #    the unmasked interior path and the pl.when-gated masked tail path.
    gen_b = jax.random.normal(k3, (2, 4, 48, 48), dtype=jnp.float32)
    gt_b = jax.random.normal(k4, (2, 4, 48, 48), dtype=jnp.float32)
    loss_b = intensity_loss(gen_b, gt_b, max_row_tile=64)
    jax.block_until_ready(loss_b)
    ref_b = jnp.mean(jnp.abs((gen_b - gt_b) ** 2))
    assert jnp.allclose(loss_b, ref_b, rtol=1e-5, atol=1e-6), (loss_b, ref_b)

    # 3) Lane-unaligned element count -> exercises the rare pad path.
    gen_c = jax.random.normal(k5, (3, 5, 7), dtype=jnp.float32)
    gt_c = jax.random.normal(k6, (3, 5, 7), dtype=jnp.float32)
    loss_c = intensity_loss(gen_c, gt_c)
    jax.block_until_ready(loss_c)
    ref_c = jnp.mean(jnp.abs((gen_c - gt_c) ** 2))
    assert jnp.allclose(loss_c, ref_c, rtol=1e-5, atol=1e-6), (loss_c, ref_c)

    print("KERNEL_OK")
</pallas_src>

<mosaic_0001>
module attributes {stable_mosaic.version = 11 : i64} {
  func.func @kernel(%arg0: i32, %arg1: i32, %arg2: memref<16x128xf32, #tpu.memory_space<vmem>>, %arg3: memref<16x128xf32, #tpu.memory_space<vmem>>, %arg4: memref<32x128xf32, #tpu.memory_space<vmem>>) attributes {dimension_semantics = [#tpu.dimension_semantics<parallel>, #tpu.dimension_semantics<arbitrary>], iteration_bounds = array<i64: 1, 1>, scalar_prefetch = 0 : i64, scratch_operands = 0 : i64, tpu.core_type = #tpu.core_type<tc>, window_params = [{transform_indices = @transform_0, window_bounds = array<i64: 16, 128>}, {transform_indices = @transform_1, window_bounds = array<i64: 16, 128>}, {transform_indices = @transform_2, window_bounds = array<i64: 32, 128>}]} {
    %c0_i32 = arith.constant 0 : i32
    %0 = arith.cmpi eq, %arg1, %c0_i32 : i32
    %1 = arith.extui %0 : i1 to i32
    %c0_i32_0 = arith.constant 0 : i32
    %2 = arith.cmpi ne, %1, %c0_i32_0 : i32
    scf.if %2 {
      %cst_8 = arith.constant 0.000000e+00 : f32
      %12 = vector.broadcast %cst_8 : f32 to vector<32x128xf32>
      %c0_9 = arith.constant 0 : index
      %c0_10 = arith.constant 0 : index
      %13 = vector.load %arg4[%c0_9, %c0_10] : memref<32x128xf32, #tpu.memory_space<vmem>>, vector<32x128xf32>
      tpu.vector_store %arg4[%c0_9, %c0_10], %12 {strides = array<i32>} : memref<32x128xf32, #tpu.memory_space<vmem>>, vector<32x128xf32>,
    } else {
    }
    %c0 = arith.constant 0 : index
    %c0_1 = arith.constant 0 : index
    %3 = vector.load %arg2[%c0, %c0_1] : memref<16x128xf32, #tpu.memory_space<vmem>>, vector<16x128xf32>
    %c0_2 = arith.constant 0 : index
    %c0_3 = arith.constant 0 : index
    %4 = vector.load %arg3[%c0_2, %c0_3] : memref<16x128xf32, #tpu.memory_space<vmem>>, vector<16x128xf32>
    %5 = arith.subf %3, %4 : vector<16x128xf32>
    %6 = arith.mulf %5, %5 : vector<16x128xf32>
    %c0_4 = arith.constant 0 : index
    %c0_5 = arith.constant 0 : index
    %7 = vector.load %arg4[%c0_4, %c0_5] : memref<32x128xf32, #tpu.memory_space<vmem>>, vector<8x128xf32>
    %8 = vector.shape_cast %6 : vector<16x128xf32> to vector<2x8x128xf32>
    %cst = arith.constant dense<0.000000e+00> : vector<8x128xf32>
    %9 = vector.multi_reduction <add>, %8, %cst [0] : vector<2x8x128xf32> to vector<8x128xf32>
    %10 = arith.addf %7, %9 : vector<8x128xf32>
    %c0_6 = arith.constant 0 : index
    %c0_7 = arith.constant 0 : index
    %11 = vector.load %arg4[%c0_6, %c0_7] : memref<32x128xf32, #tpu.memory_space<vmem>>, vector<8x128xf32>
    tpu.vector_store %arg4[%c0_6, %c0_7], %10 {strides = array<i32>} : memref<32x128xf32, #tpu.memory_space<vmem>>, vector<8x128xf32>,
    return
  }
  func.func @transform_0(%arg0: i32, %arg1: i32) -> (i32, i32) {
    %c1_i32 = arith.constant 1 : i32
    %0 = arith.muli %arg0, %c1_i32 : i32
    %1 = arith.addi %0, %arg1 : i32
    %c0_i32 = arith.constant 0 : i32
    %c0_i32_0 = arith.constant 0 : i32
    return %1, %c0_i32 : i32, i32
  }
  func.func @transform_1(%arg0: i32, %arg1: i32) -> (i32, i32) {
    %c1_i32 = arith.constant 1 : i32
    %0 = arith.muli %arg0, %c1_i32 : i32
    %1 = arith.addi %0, %arg1 : i32
    %c0_i32 = arith.constant 0 : i32
    %c0_i32_0 = arith.constant 0 : i32
    return %1, %c0_i32 : i32, i32
  }
  func.func @transform_2(%arg0: i32, %arg1: i32) -> (i32, i32) {
    %c0_i32 = arith.constant 0 : i32
    %c0_i32_0 = arith.constant 0 : i32
    return %arg0, %c0_i32 : i32, i32
  }
}

</mosaic_0001>

<llo_original>
// kernel: tpu_custom_call.1
$region0: #{tpu_custom_call.1}
  #allocation0 [shape = 'u32[]', space=smem, size = 0x4, offset = 0x4, fixed_abs, tag = 'smem constant byte address 0x4 - core index']
  #allocation1 [shape = 'u32[144,128]{1,0:T(1,128)}', space=vmem, size = 0x12000, scoped, tag = 'internal scratch']
  %s0 = inlined_call_operand.hbm [shape: f32[16,128], index: 0, kind: input, shape index: {}]
  %s1 = inlined_call_operand.hbm [shape: f32[16,128], index: 1, kind: input, shape index: {}]
  %s2 = inlined_call_operand.hbm [shape: f32[32,128], index: 2, kind: output, shape index: {}]
  %s3 = sld [smem:[#allocation0]]
  $region30: #{tpu_custom_call.1} parent=0
    _
  %s5 = ssub.s32 1, %s3
  %s6 = scalar_select 0, %s5, %s3
  $region1: #{tpu_custom_call.1} parent=0
    #allocation2 [shape = 'u8[8192]{0}', space=vmem, size = 0x2000, scoped, tag = 'input window, operand 0, single buffered']
    #allocation3 [shape = 's32[1]{0}', space=sflag, size = 0x4, scoped, tag = 'scoped memory for tpu_custom_call.1']
    #allocation4 [shape = 's32[1]{0}', space=sflag, size = 0x4, scoped, tag = 'scoped memory for tpu_custom_call.1']
    #allocation5 [shape = 'u8[8192]{0}', space=vmem, size = 0x2000, scoped, tag = 'input window, operand 1, single buffered']
    #allocation6 [shape = 's32[1]{0}', space=sflag, size = 0x4, scoped, tag = 'scoped memory for tpu_custom_call.1']
    #allocation7 [shape = 'u8[16384]{0}', space=vmem, size = 0x4000, scoped, tag = 'output window, operand 0, single buffered']
    %7 = vsyncpa [#allocation3], 0
    %8 = vsyncpa [#allocation6], 0
    %9 = vsyncpa [#allocation4], 0
    // Predicated region
    $region2: #{tpu_custom_call.1} parent=1 // pred_check
      _
    $region3: #{tpu_custom_call.1} parent=1 // pred_check_branch
      %11 = sbr.rel (0) target = $region5
    $region4: #{tpu_custom_call.1} parent=1 // pred_region
      %s12 = sadd.s32 0, 0
      %s13 = smul.u32 2, %s12
      %s15 = ssub.s32 256, 256
      %16 = vsyncadd [#allocation3], %s15
      %s17 = smul.addr %s13, 128
      %s18 = scalar_lea.hbm %s0, %s17
      %s19 = sshll.u32 [#allocation2], 4
      %s20 = int_to_ptr.vmem [resolvable:$true] %s19
      %25 = dma.hbm_to_vmem [thread:$0]  %s18, 256, %s20, [#allocation3], 128, 128, 8
    $region5: #{tpu_custom_call.1} parent=1 // pred_fallthru
      _
    // Predicated region
    $region6: #{tpu_custom_call.1} parent=1 // pred_check
      _
    $region7: #{tpu_custom_call.1} parent=1 // pred_check_branch
      %27 = sbr.rel (0) target = $region9
    $region8: #{tpu_custom_call.1} parent=1 // pred_region
      %s28 = sadd.s32 0, 0
      %s29 = smul.u32 2, %s28
      %s31 = ssub.s32 256, 256
      %32 = vsyncadd [#allocation6], %s31
      %s33 = smul.addr %s29, 128
      %s34 = scalar_lea.hbm %s1, %s33
      %s35 = sshll.u32 [#allocation5], 4
      %s36 = int_to_ptr.vmem [resolvable:$true] %s35
      %41 = dma.hbm_to_vmem [thread:$0]  %s34, 256, %s36, [#allocation6], 128, 128, 8
    $region9: #{tpu_custom_call.1} parent=1 // pred_fallthru
      _
    // Predicated region
    $region10: #{tpu_custom_call.1} parent=1 // pred_check
      _
    $region11: #{tpu_custom_call.1} parent=1 // pred_check_branch
      %43 = sbr.rel (0) target = $region13
    $region12: #{tpu_custom_call.1} parent=1 // pred_region
      %44 = dma.done [#allocation3], 256
    $region13: #{tpu_custom_call.1} parent=1 // pred_fallthru
      _
    // Predicated region
    $region14: #{tpu_custom_call.1} parent=1 // pred_check
      _
    $region15: #{tpu_custom_call.1} parent=1 // pred_check_branch
      %46 = sbr.rel (0) target = $region17
    $region16: #{tpu_custom_call.1} parent=1 // pred_region
      %47 = dma.done [#allocation6], 256
    $region17: #{tpu_custom_call.1} parent=1 // pred_fallthru
      _
    %s48 = sadd.s32 0, 0
    %s49 = smul.u32 2, %s48
    %s50 = sadd.s32 0, 0
    %s51 = smul.u32 2, %s50
    %p52 = scmp.eq.s32.totalorder 0, 0
    // Predicated region
    $region18: #{tpu_custom_call.1} parent=1 // pred_check
      %p53 = pneg %p52
    $region19: #{tpu_custom_call.1} parent=1 // pred_check_branch
      %55 = sbr.rel (%p53) target = $region21
    $region20: #{tpu_custom_call.1} parent=1 // pred_region
      %56 = vst [vmem:[#allocation7] sm:$0xff] 0.0
      %57 = vst [vmem:[#allocation7 + $0x8] sm:$0xff] 0.0
      %58 = vst [vmem:[#allocation7 + $0x10] sm:$0xff] 0.0
      %59 = vst [vmem:[#allocation7 + $0x18] sm:$0xff] 0.0
    $region21: #{tpu_custom_call.1} parent=1 // pred_fallthru
      _
    %v60 = vld [vmem:[#allocation2] sm:$0xff]
    %v61 = vld [vmem:[#allocation2 + $0x8] sm:$0xff]
    %v62 = vld [vmem:[#allocation5] sm:$0xff]
    %v63 = vld [vmem:[#allocation5 + $0x8] sm:$0xff]
    %v64 = vsub.f32 %v60, %v62
    %v65 = vsub.f32 %v61, %v63
    %v66 = vmul.f32 %v64, %v64
    %v67 = vmul.f32 %v65, %v65
    %v68 = vld [vmem:[#allocation7] sm:$0xff]
    %v69 = vadd.f32 %v66, %v67
    %v70 = vadd.f32 %v68, %v69
    %71 = vst [vmem:[#allocation7] sm:$0xff] %v70
    // Predicated region
    $region22: #{tpu_custom_call.1} parent=1 // pred_check
      _
    $region23: #{tpu_custom_call.1} parent=1 // pred_check_branch
      %73 = sbr.rel (0) target = $region25
    $region24: #{tpu_custom_call.1} parent=1 // pred_region
      %s75 = ssub.s32 512, 512
      %76 = vsyncadd [#allocation4], %s75
      %s77 = sshll.u32 [#allocation7], 4
      %s78 = int_to_ptr.vmem [resolvable:$true] %s77
      %83 = dma.vmem_to_hbm [thread:$0]  %s78, 512, %s2, [#allocation4], 128, 128, 8
    $region25: #{tpu_custom_call.1} parent=1 // pred_fallthru
      _
    // Predicated region
    $region26: #{tpu_custom_call.1} parent=1 // pred_check
      _
    $region27: #{tpu_custom_call.1} parent=1 // pred_check_branch
      %85 = sbr.rel (0) target = $region29
    $region28: #{tpu_custom_call.1} parent=1 // pred_region
      %86 = dma.done [#allocation4], 512
    $region29: #{tpu_custom_call.1} parent=1 // pred_fallthru
      _
    %87 = vsyncpa [#allocation3], 1
    %88 = vsyncpa [#allocation6], 1
    %89 = vsyncpa [#allocation4], 1

</llo_original>
